<compile_context>
chip_gen: v6e
topology: v6e:2x2x1
jax: 0.10.0
libtpu: 0.0.40
codegen_flags: <defaults>
</compile_context>

<pallas_src>
import jax
import jax.numpy as jnp
from jax.experimental import pallas as pl
from jax.experimental.pallas import tpu as pltpu


def _make_avg_kernel(inv_t):
    def _avg_kernel(x_ref, o_ref):
        # x_ref: (Bb, T, tc) — T on sublanes, tc on lanes.
        x = x_ref[...].astype(jnp.float32)
        s = jnp.sum(x, axis=1)              # sublane reduction -> XLU slot
        o_ref[...] = (s * inv_t).astype(o_ref.dtype)
    return _avg_kernel


def _choose_avg_tiles(B, T, C, itemsize, vmem_budget_bytes=4 * 1024 * 1024):
    """Pick (Bb, tc) block sizes.

    tc: multiple of 128 that divides C (lane-dense stores), else full C.
    Bb: multiple of 8 that divides B (fills output sublanes), else full B.
    Input tile (Bb, T, tc) is kept within a small VMEM budget so the
    double-buffered pipeline fits comfortably on v7x (64 MiB VMEM) too.
    """
    # Lane (last-dim) tile.
    if C % 128 == 0:
        tc = 128
        cand = 128
        while cand <= min(C, 2048):
            if C % cand == 0:
                tc = cand
            cand += 128
    else:
        tc = C

    # Batch tile.
    if B % 8 == 0:
        max_bb = max(8, vmem_budget_bytes // max(1, T * tc * itemsize))
        bb = 8
        cand = 8
        while cand <= min(B, max_bb):
            if B % cand == 0:
                bb = cand
            cand += 8
    else:
        bb = B
    return bb, tc


def _consensus_avg(x):
    B, T, C = x.shape
    bb, tc = _choose_avg_tiles(B, T, C, x.dtype.itemsize)
    grid = (pl.cdiv(B, bb), pl.cdiv(C, tc))

    out2d = pl.pallas_call(
        _make_avg_kernel(1.0 / float(T)),
        out_shape=jax.ShapeDtypeStruct((B, C), x.dtype),
        grid=grid,
        in_specs=[pl.BlockSpec((bb, T, tc), lambda b, c: (b, 0, c))],
        out_specs=pl.BlockSpec((bb, tc), lambda b, c: (b, c)),
        compiler_params=pltpu.CompilerParams(
            dimension_semantics=("parallel", "parallel"),
        ),
    )(x)
    return out2d.reshape(B, 1, C)


class ConsensusModule:
    def __init__(self, consensus_type, dim=1):
        self.consensus_type = (
            consensus_type if consensus_type != "rnn" else "identity"
        )
        # Only dim=1 (the PyTorch default used throughout the repo) supported.
        assert dim == 1, "Pallas ConsensusModule implemented for dim=1"
        self.dim = dim

    def __call__(self, x):
        if self.consensus_type == "avg":
            return _consensus_avg(x)
        elif self.consensus_type == "identity":
            # Pure pass-through: no kernel, no HBM traffic.
            return x
        else:
            # PyTorch returns None for unknown consensus types.
            return None


if __name__ == "__main__":
    key = jax.random.PRNGKey(0)

    # --- primary small test: B=2, T=8 segments, C=32 features (f32) ---
    B, T, C = 2, 8, 32
    x = jax.random.normal(key, (B, T, C), dtype=jnp.float32)

    avg_mod = ConsensusModule("avg", dim=1)
    out_avg = jax.block_until_ready(avg_mod(x))
    ref = jnp.mean(x, axis=1, keepdims=True)
    assert out_avg.shape == (B, 1, C)
    assert jnp.allclose(out_avg, ref, atol=1e-5, rtol=1e-5)

    # 'identity' path: pass-through, no copy.
    id_mod = ConsensusModule("identity", dim=1)
    out_id = jax.block_until_ready(id_mod(x))
    assert out_id.shape == (B, T, C)
    assert jnp.allclose(out_id, x)

    # --- secondary test: lane-dense tiling + bf16 input (exercises grid) ---
    B2, T2, C2 = 16, 8, 256
    x2 = jax.random.normal(jax.random.PRNGKey(1), (B2, T2, C2), dtype=jnp.bfloat16)
    out2 = jax.block_until_ready(avg_mod(x2))
    ref2 = jnp.mean(x2.astype(jnp.float32), axis=1, keepdims=True).astype(jnp.bfloat16)
    assert out2.shape == (B2, 1, C2)
    assert jnp.allclose(
        out2.astype(jnp.float32), ref2.astype(jnp.float32), atol=2e-2, rtol=2e-2
    )

    print("KERNEL_OK")
</pallas_src>

<mosaic_0001>
module attributes {stable_mosaic.version = 11 : i64} {
  func.func @_avg_kernel(%arg0: i32, %arg1: i32, %arg2: memref<2x8x32xf32, #tpu.memory_space<vmem>>, %arg3: memref<2x32xf32, #tpu.memory_space<vmem>>) attributes {dimension_semantics = [#tpu.dimension_semantics<parallel>, #tpu.dimension_semantics<parallel>], iteration_bounds = array<i64: 1, 1>, scalar_prefetch = 0 : i64, scratch_operands = 0 : i64, tpu.core_type = #tpu.core_type<tc>, window_params = [{transform_indices = @transform_0, window_bounds = array<i64: 2, 8, 32>}, {transform_indices = @transform_1, window_bounds = array<i64: 2, 32>}]} {
    %c0 = arith.constant 0 : index
    %c0_0 = arith.constant 0 : index
    %c0_1 = arith.constant 0 : index
    %0 = vector.load %arg2[%c0, %c0_0, %c0_1] : memref<2x8x32xf32, #tpu.memory_space<vmem>>, vector<2x8x32xf32>
    %cst = arith.constant dense<0.000000e+00> : vector<2x32xf32>
    %1 = vector.multi_reduction <add>, %0, %cst [1] : vector<2x8x32xf32> to vector<2x32xf32>
    %cst_2 = arith.constant 1.250000e-01 : f32
    %2 = vector.broadcast %cst_2 : f32 to vector<2x32xf32>
    %3 = arith.mulf %1, %2 : vector<2x32xf32>
    %c0_3 = arith.constant 0 : index
    %c0_4 = arith.constant 0 : index
    %4 = vector.load %arg3[%c0_3, %c0_4] : memref<2x32xf32, #tpu.memory_space<vmem>>, vector<2x32xf32>
    tpu.vector_store %arg3[%c0_3, %c0_4], %3 {strides = array<i32>} : memref<2x32xf32, #tpu.memory_space<vmem>>, vector<2x32xf32>,
    return
  }
  func.func @transform_0(%arg0: i32, %arg1: i32) -> (i32, i32, i32) {
    %c0_i32 = arith.constant 0 : i32
    %c0_i32_0 = arith.constant 0 : i32
    return %arg0, %c0_i32, %arg1 : i32, i32, i32
  }
  func.func @transform_1(%arg0: i32, %arg1: i32) -> (i32, i32) {
    %c0_i32 = arith.constant 0 : i32
    return %arg0, %arg1 : i32, i32
  }
}

</mosaic_0001>

<llo_original>
// kernel: tpu_custom_call.1
$region0: #{tpu_custom_call.1}
  #allocation0 [shape = 'u32[]', space=smem, size = 0x4, offset = 0x4, fixed_abs, tag = 'smem constant byte address 0x4 - core index']
  #allocation1 [shape = 'u32[144,128]{1,0:T(1,128)}', space=vmem, size = 0x12000, scoped, tag = 'internal scratch']
  %s0 = inlined_call_operand.hbm [shape: f32[2,8,32], index: 0, kind: input, shape index: {}]
  %s1 = inlined_call_operand.hbm [shape: f32[2,32], index: 1, kind: output, shape index: {}]
  %s2 = sld [smem:[#allocation0]]
  $region18: #{tpu_custom_call.1} parent=0
    _
  %s4 = ssub.s32 1, %s2
  %s5 = scalar_select 0, %s4, %s2
  $region1: #{tpu_custom_call.1} parent=0
    #allocation2 [shape = 'u8[8192]{0}', space=vmem, size = 0x2000, scoped, tag = 'input window, operand 0, single buffered']
    #allocation3 [shape = 's32[1]{0}', space=sflag, size = 0x4, scoped, tag = 'scoped memory for tpu_custom_call.1']
    #allocation4 [shape = 's32[1]{0}', space=sflag, size = 0x4, scoped, tag = 'scoped memory for tpu_custom_call.1']
    #allocation5 [shape = 'u8[1024]{0}', space=vmem, size = 0x400, scoped, tag = 'output window, operand 0, single buffered']
    %6 = vsyncpa [#allocation3], 0
    %7 = vsyncpa [#allocation4], 0
    // Predicated region
    $region2: #{tpu_custom_call.1} parent=1 // pred_check
      _
    $region3: #{tpu_custom_call.1} parent=1 // pred_check_branch
      %9 = sbr.rel (0) target = $region5
    $region4: #{tpu_custom_call.1} parent=1 // pred_region
      %s11 = ssub.s32 256, 256
      %12 = vsyncadd [#allocation3], %s11
      %s13 = sshll.u32 [#allocation2], 4
      %s14 = int_to_ptr.vmem [resolvable:$true] %s13
      %19 = dma.hbm_to_vmem [thread:$0]  %s0, 256, %s14, [#allocation3], 128, 128, 8
    $region5: #{tpu_custom_call.1} parent=1 // pred_fallthru
      _
    // Predicated region
    $region6: #{tpu_custom_call.1} parent=1 // pred_check
      _
    $region7: #{tpu_custom_call.1} parent=1 // pred_check_branch
      %21 = sbr.rel (0) target = $region9
    $region8: #{tpu_custom_call.1} parent=1 // pred_region
      %22 = dma.done [#allocation3], 256
    $region9: #{tpu_custom_call.1} parent=1 // pred_fallthru
      _
    %v23 = vld [vmem:[#allocation2] sm:$0xff]
    %v24 = vld [vmem:[#allocation2 + $0x8] sm:$0xff]
    %vm25 = vcmask 261120
    %v26 = vsel %vm25, %v23, 0.0
    %v27 = vrot.slane %v26, 4
    %v28 = vadd.f32 %v26, %v27
    %v29 = vrot.slane %v28, 2
    %v30 = vadd.f32 %v28, %v29
    %v31 = vrot.slane %v30, 1
    %v32 = vadd.f32 %v30, %v31
    %v33 = vsel %vm25, %v24, 0.0
    %v34 = vrot.slane %v33, 4
    %v35 = vadd.f32 %v33, %v34
    %v36 = vrot.slane %v35, 2
    %v37 = vadd.f32 %v35, %v36
    %v38 = vrot.slane %v37, 1
    %v39 = vadd.f32 %v37, %v38
    %v40 = vmul.f32 %v32, 0.125
    %v41 = vmul.f32 %v39, 0.125
    %vm44 = vcmask 1041409
    %v45 = vsel %vm44, %v41, %v40
    %vm47 = vcmask 254976
    %48 = vst.msk [vmem:[#allocation5] sm:$0x3] %vm47, %v45
    // Predicated region
    $region10: #{tpu_custom_call.1} parent=1 // pred_check
      _
    $region11: #{tpu_custom_call.1} parent=1 // pred_check_branch
      %50 = sbr.rel (0) target = $region13
    $region12: #{tpu_custom_call.1} parent=1 // pred_region
      %s52 = ssub.s32 32, 32
      %53 = vsyncadd [#allocation4], %s52
      %s55 = sshll.u32 [#allocation5], 4
      %s56 = int_to_ptr.vmem [resolvable:$true] %s55
      %58 = dma.vmem_to_hbm [thread:$0]  %s56, 32, %s1, [#allocation4]
    $region13: #{tpu_custom_call.1} parent=1 // pred_fallthru
      _
    // Predicated region
    $region14: #{tpu_custom_call.1} parent=1 // pred_check
      _
    $region15: #{tpu_custom_call.1} parent=1 // pred_check_branch
      %60 = sbr.rel (0) target = $region17
    $region16: #{tpu_custom_call.1} parent=1 // pred_region
      %61 = dma.done [#allocation4], 32
    $region17: #{tpu_custom_call.1} parent=1 // pred_fallthru
      _
    %62 = vsyncpa [#allocation3], 1
    %63 = vsyncpa [#allocation4], 1

</llo_original>
